<compile_context>
chip_gen: v7x
topology: tpu7x:2x2x1
jax: 0.10.0
libtpu: 0.0.40
codegen_flags: <defaults>
</compile_context>

<pallas_src>
import functools
import math

import jax
import jax.numpy as jnp
from jax.experimental import pallas as pl
from jax.experimental.pallas import tpu as pltpu

_HALO = 16  # bf16 sublane tile height -> y1 staging store is tile-aligned


def _basic_block_kernel(NB, H, W, Cin, Cout,
                        xp_ref, a1c_ref, a1s_ref, b1_ref, a2_ref, bo_ref,
                        o_ref, y_ref):
    """Fused: conv3x3 -> BN -> ReLU -> conv3x3 -> BN (+ 1x1-conv+BN shortcut) -> add -> ReLU.

    xp_ref  : (NB, H+2, W*Cin)       bf16 input rows, zero-padded by 1 in H
              (W padding is folded into the Toeplitz weights)
    a1c_ref : (W*Cin, 2*W*Cout)      bf16 [conv1 ky=1 Toeplitz | 1x1 shortcut] weights
    a1s_ref : (2, W*Cin, W*Cout)     bf16 conv1 ky=0 / ky=2 Toeplitz weights
    b1_ref  : (1, W*Cout)            f32 lane-tiled folded BN1 bias
    a2_ref  : (3, W*Cout, W*Cout)    bf16 conv2 row-Toeplitz weights
    bo_ref  : (1, W*Cout)            f32 lane-tiled folded (BN2 + shortcut-BN) bias
    o_ref   : (NB, H, W*Cout)        output rows (lane dense)
    y_ref   : (NB, _HALO+H+1, W*Cout) bf16 scratch: y1 staged at rows [16, 16+H)
              with zero rows at 15 and 16+H (the H halo for conv2)
    """
    WCi = W * Cin
    WCo = W * Cout
    M = NB * H

    # ---- conv1 ky=1 fused with the 1x1 shortcut (256-wide MXU output) ----------
    x1 = xp_ref[:, 1:1 + H, :].reshape(M, WCi)            # center rows (ref-offset load)
    z = jnp.dot(x1, a1c_ref[...], preferred_element_type=jnp.float32)   # (M, 2*WCo)
    acc1 = z[:, :WCo]                                      # conv1 center contribution
    shortcut = z[:, WCo:]                                  # 1x1-conv + BNd (scale folded)

    # ---- conv1 ky=0 / ky=2 contributions (ref-offset loads, no value slicing) --
    acc1 = acc1 + jnp.dot(xp_ref[:, 0:H, :].reshape(M, WCi), a1s_ref[0],
                          preferred_element_type=jnp.float32)
    acc1 = acc1 + jnp.dot(xp_ref[:, 2:2 + H, :].reshape(M, WCi), a1s_ref[1],
                          preferred_element_type=jnp.float32)

    # ---- bn1 bias + relu --------------------------------------------------------
    y1 = jnp.maximum(acc1 + b1_ref[...], 0.0)              # (M, WCo) f32

    # ---- stage y1 (bf16) with a zero H-halo; interior store is tile-aligned ----
    @pl.when(pl.program_id(0) == 0)
    def _():  # halo rows never change -> write them once
        zero_row = jnp.zeros((NB, 1, WCo), jnp.bfloat16)
        y_ref[:, _HALO - 1:_HALO, :] = zero_row
        y_ref[:, _HALO + H:_HALO + H + 1, :] = zero_row
    y_ref[:, _HALO:_HALO + H, :] = y1.reshape(NB, H, WCo).astype(jnp.bfloat16)

    # ---- conv2 (3x3) + bn2/bnd bias, shifted rows loaded straight from the ref --
    acc2 = jnp.dot(y_ref[:, _HALO:_HALO + H, :].reshape(M, WCo), a2_ref[1],
                   preferred_element_type=jnp.float32)
    acc2 = acc2 + jnp.dot(y_ref[:, _HALO - 1:_HALO - 1 + H, :].reshape(M, WCo),
                          a2_ref[0], preferred_element_type=jnp.float32)
    acc2 = acc2 + jnp.dot(y_ref[:, _HALO + 1:_HALO + 1 + H, :].reshape(M, WCo),
                          a2_ref[2], preferred_element_type=jnp.float32)

    # ---- residual add + relu, lane-dense store ----------------------------------
    out = jnp.maximum(acc2 + shortcut + bo_ref[...], 0.0)
    o_ref[...] = out.reshape(NB, H, WCo).astype(o_ref.dtype)


def _fold_bn(gamma, beta, mean, var, eps=1e-5):
    """Eval-mode BatchNorm folded to per-channel (scale, bias)."""
    scale = gamma / jnp.sqrt(var + eps)
    return scale, beta - mean * scale


def _row_toeplitz_3x3(w_hwio, scale, W):
    """Pack a (3,3,Cin,Cout) HWIO conv weight (+ folded BN scale) into row-Toeplitz
    matrices of shape (3, W*Cin, W*Cout):

      A[ky][win*Cin + ci, wout*Cout + co] = w[ky, kx, ci, co] * scale[co]
        with win = wout + kx - 1 (out-of-range columns dropped == zero W-padding).
    """
    ws = w_hwio * scale[None, None, None, :]
    mats = []
    for ky in range(3):
        m = sum(jnp.kron(jnp.eye(W, W, k=1 - kx, dtype=ws.dtype), ws[ky, kx])
                for kx in range(3))
        mats.append(m)
    return jnp.stack(mats)


def basic_block_forward(x_nchw, params, *, is_downsample=False,
                        out_dtype=jnp.float32):
    """x_nchw: (N, Cin, H, W) float32 (PyTorch layout). Returns (N, Cout, H, W).

    `out_dtype=jnp.bfloat16` halves output store/HBM traffic if the consumer is bf16.
    """
    if is_downsample:
        # TODO(synk): stride-2 conv1 / stride-2 1x1 shortcut not implemented.
        raise NotImplementedError("is_downsample=True (stride 2) is not supported")

    N, Cin, H, W = x_nchw.shape
    w1, w2, wd = params["w1"], params["w2"], params["wd"]
    Cout = w1.shape[-1]
    WCi, WCo = W * Cin, W * Cout

    s1, b1 = _fold_bn(*params["bn1"])
    s2, b2 = _fold_bn(*params["bn2"])
    sd, bd = _fold_bn(*params["bnd"])

    # BN scales folded into conv weights; weights re-packed as lane-dense
    # row-Toeplitz / block-diagonal matmul operands (bf16 for the MXU).
    a1_full = _row_toeplitz_3x3(w1, s1, W)                       # (3, WCi, WCo) f32
    ad_full = jnp.kron(jnp.eye(W, dtype=w1.dtype), wd[0, 0] * sd)  # (WCi, WCo)
    # Fuse the 1x1 shortcut onto conv1's ky=1 weight along the output dim (256 wide).
    a1c = jnp.concatenate([a1_full[1], ad_full], axis=1).astype(jnp.bfloat16)
    a1s = jnp.stack([a1_full[0], a1_full[2]]).astype(jnp.bfloat16)
    a2 = _row_toeplitz_3x3(w2, s2, W).astype(jnp.bfloat16)       # (3, WCo, WCo)
    b1t = jnp.tile(b1, W).reshape(1, WCo).astype(jnp.float32)
    bot = jnp.tile(b2 + bd, W).reshape(1, WCo).astype(jnp.float32)  # fused bn2+bnd bias

    # NCHW -> (N, H+2, W*Cin) bf16 rows with zero H-halo (single tiny fused XLA op).
    x_rows = jnp.transpose(x_nchw, (0, 2, 3, 1)).reshape(N, H, WCi)
    x_rows = jnp.pad(x_rows, ((0, 0), (1, 1), (0, 0))).astype(jnp.bfloat16)

    # Batch grid axis: target M = nb*H >= 256 rows per step (fills the MXU) while
    # keeping N % nb == 0; weights use constant index maps so they stay resident.
    nb = math.gcd(N, max(1, 256 // H)) if H <= 256 else 1
    grid = (N // nb,)

    # Advisory cost so XLA overlaps the surrounding transposes with this tiny call.
    flops = (2 * N * H * WCi * (2 * WCo)          # fused conv1-ky1 + shortcut
             + 2 * 2 * N * H * WCi * WCo          # conv1 ky=0,2
             + 3 * 2 * N * H * WCo * WCo)         # conv2
    bytes_accessed = (x_rows.size * 2 + a1c.size * 2 + a1s.size * 2 + a2.size * 2
                      + (b1t.size + bot.size) * 4
                      + N * H * WCo * jnp.dtype(out_dtype).itemsize)
    cost = pl.CostEstimate(flops=int(flops), transcendentals=0,
                           bytes_accessed=int(bytes_accessed))

    kernel = functools.partial(_basic_block_kernel, nb, H, W, Cin, Cout)
    out_rows = pl.pallas_call(
        kernel,
        out_shape=jax.ShapeDtypeStruct((N, H, WCo), out_dtype),
        grid_spec=pltpu.PrefetchScalarGridSpec(
            num_scalar_prefetch=0,
            grid=grid,
            in_specs=[
                pl.BlockSpec((nb, H + 2, WCi), lambda i: (i, 0, 0)),   # x rows
                pl.BlockSpec((WCi, 2 * WCo), lambda i: (0, 0)),        # a1 ky=1 | shortcut
                pl.BlockSpec((2, WCi, WCo), lambda i: (0, 0, 0)),      # a1 ky=0,2
                pl.BlockSpec((1, WCo), lambda i: (0, 0)),              # b1
                pl.BlockSpec((3, WCo, WCo), lambda i: (0, 0, 0)),      # a2
                pl.BlockSpec((1, WCo), lambda i: (0, 0)),              # b2 + bd
            ],
            out_specs=pl.BlockSpec((nb, H, WCo), lambda i: (i, 0, 0)),
            scratch_shapes=[
                pltpu.VMEM((nb, _HALO + H + 1, WCo), jnp.bfloat16),    # y1 + halo
            ],
        ),
        compiler_params=pltpu.CompilerParams(dimension_semantics=("parallel",)),
        cost_estimate=cost,
    )(x_rows, a1c, a1s, b1t, a2, bot)

    # (N, H, W*Cout) -> NCHW
    return jnp.transpose(out_rows.reshape(N, H, W, Cout), (0, 3, 1, 2))


if __name__ == "__main__":
    N, Cin, Cout, H, W = 2, 4, 8, 16, 16
    keys = jax.random.split(jax.random.PRNGKey(0), 16)

    x = jax.random.normal(keys[0], (N, Cin, H, W), jnp.float32)
    w1 = jax.random.normal(keys[1], (3, 3, Cin, Cout), jnp.float32) * 0.1   # HWIO
    w2 = jax.random.normal(keys[2], (3, 3, Cout, Cout), jnp.float32) * 0.1
    wd = jax.random.normal(keys[3], (1, 1, Cin, Cout), jnp.float32) * 0.1

    def bn_params(kg, kb, km, kv, c):
        gamma = jax.random.normal(kg, (c,), jnp.float32) * 0.1 + 1.0
        beta = jax.random.normal(kb, (c,), jnp.float32) * 0.1
        mean = jax.random.normal(km, (c,), jnp.float32) * 0.1
        var = jax.random.uniform(kv, (c,), jnp.float32, minval=0.5, maxval=1.5)
        return gamma, beta, mean, var

    params = dict(w1=w1, w2=w2, wd=wd,
                  bn1=bn_params(*keys[4:8], Cout),
                  bn2=bn_params(*keys[8:12], Cout),
                  bnd=bn_params(*keys[12:16], Cout))

    out = jax.block_until_ready(basic_block_forward(x, params))

    # Pure-JAX f32 reference (same eval-mode folded-BN semantics).
    x_nhwc = jnp.transpose(x, (0, 2, 3, 1))

    def conv(v, w):
        return jax.lax.conv_general_dilated(
            v, w, (1, 1), "SAME", dimension_numbers=("NHWC", "HWIO", "NHWC"))

    s1, b1 = _fold_bn(*params["bn1"])
    s2, b2 = _fold_bn(*params["bn2"])
    sd, bd = _fold_bn(*params["bnd"])
    y = jnp.maximum(conv(x_nhwc, w1) * s1 + b1, 0.0)
    y = conv(y, w2) * s2 + b2
    shortcut = conv(x_nhwc, wd) * sd + bd
    ref = jnp.transpose(jnp.maximum(shortcut + y, 0.0), (0, 3, 1, 2))

    assert out.shape == (N, Cout, H, W)
    # bf16 MXU operands -> loosened tolerance vs the f32 reference.
    assert jnp.allclose(out, ref, atol=5e-2, rtol=5e-2), (
        "mismatch vs JAX reference: max |diff| = "
        f"{float(jnp.max(jnp.abs(out - ref)))}")
    print("KERNEL_OK")
</pallas_src>

<mosaic_0001>
module attributes {stable_mosaic.version = 11 : i64} {
  func.func @_basic_block_kernel(%arg0: i32, %arg1: memref<2x18x64xbf16, #tpu.memory_space<vmem>>, %arg2: memref<64x256xbf16, #tpu.memory_space<vmem>>, %arg3: memref<2x64x128xbf16, #tpu.memory_space<vmem>>, %arg4: memref<1x128xf32, #tpu.memory_space<vmem>>, %arg5: memref<3x128x128xbf16, #tpu.memory_space<vmem>>, %arg6: memref<1x128xf32, #tpu.memory_space<vmem>>, %arg7: memref<2x16x128xf32, #tpu.memory_space<vmem>>, %arg8: memref<2x33x128xbf16, #tpu.memory_space<vmem>>) attributes {dimension_semantics = [#tpu.dimension_semantics<parallel>], iteration_bounds = array<i64: 1>, scalar_prefetch = 0 : i64, scratch_operands = 1 : i64, tpu.core_type = #tpu.core_type<tc>, window_params = [{transform_indices = @transform_0, window_bounds = array<i64: 2, 18, 64>}, {pipeline_mode = #tpu.pipeline_mode<synchronous>, transform_indices = @transform_1, window_bounds = array<i64: 64, 256>}, {pipeline_mode = #tpu.pipeline_mode<synchronous>, transform_indices = @transform_2, window_bounds = array<i64: 2, 64, 128>}, {pipeline_mode = #tpu.pipeline_mode<synchronous>, transform_indices = @transform_3, window_bounds = array<i64: 1, 128>}, {pipeline_mode = #tpu.pipeline_mode<synchronous>, transform_indices = @transform_4, window_bounds = array<i64: 3, 128, 128>}, {pipeline_mode = #tpu.pipeline_mode<synchronous>, transform_indices = @transform_5, window_bounds = array<i64: 1, 128>}, {transform_indices = @transform_6, window_bounds = array<i64: 2, 16, 128>}]} {
    %c0 = arith.constant 0 : index
    %c1 = arith.constant 1 : index
    %c0_0 = arith.constant 0 : index
    %0 = vector.load %arg1[%c0, %c1, %c0_0] : memref<2x18x64xbf16, #tpu.memory_space<vmem>>, vector<2x16x64xbf16>
    %1 = vector.shape_cast %0 : vector<2x16x64xbf16> to vector<32x64xbf16>
    %c0_1 = arith.constant 0 : index
    %c0_2 = arith.constant 0 : index
    %2 = vector.load %arg2[%c0_1, %c0_2] : memref<64x256xbf16, #tpu.memory_space<vmem>>, vector<64x256xbf16>
    %cst = arith.constant dense<0.000000e+00> : vector<32x256xf32>
    %3 = tpu.matmul %1, %2, %cst {dimension_numbers = #tpu.dot_dimension_numbers<[1], [0], [0], [1], [0, 0, 1, 1], [], []>} : vector<32x64xbf16>, vector<64x256xbf16>, vector<32x256xf32> -> vector<32x256xf32>
    %4 = vector.extract_strided_slice %3 {offsets = [0, 0], sizes = [32, 128], strides = [1, 1]} : vector<32x256xf32> to vector<32x128xf32>
    %5 = vector.extract_strided_slice %3 {offsets = [0, 128], sizes = [32, 128], strides = [1, 1]} : vector<32x256xf32> to vector<32x128xf32>
    %c0_3 = arith.constant 0 : index
    %c0_4 = arith.constant 0 : index
    %c0_5 = arith.constant 0 : index
    %6 = vector.load %arg1[%c0_3, %c0_4, %c0_5] : memref<2x18x64xbf16, #tpu.memory_space<vmem>>, vector<2x16x64xbf16>
    %7 = vector.shape_cast %6 : vector<2x16x64xbf16> to vector<32x64xbf16>
    %c0_6 = arith.constant 0 : index
    %c0_7 = arith.constant 0 : index
    %c0_8 = arith.constant 0 : index
    %8 = vector.load %arg3[%c0_6, %c0_7, %c0_8] : memref<2x64x128xbf16, #tpu.memory_space<vmem>>, vector<1x64x128xbf16>
    %9 = vector.shape_cast %8 : vector<1x64x128xbf16> to vector<64x128xbf16>
    %cst_9 = arith.constant dense<0.000000e+00> : vector<32x128xf32>
    %10 = tpu.matmul %7, %9, %cst_9 {dimension_numbers = #tpu.dot_dimension_numbers<[1], [0], [0], [1], [0, 0, 1, 1], [], []>} : vector<32x64xbf16>, vector<64x128xbf16>, vector<32x128xf32> -> vector<32x128xf32>
    %11 = arith.addf %4, %10 : vector<32x128xf32>
    %c0_10 = arith.constant 0 : index
    %c2 = arith.constant 2 : index
    %c0_11 = arith.constant 0 : index
    %12 = vector.load %arg1[%c0_10, %c2, %c0_11] : memref<2x18x64xbf16, #tpu.memory_space<vmem>>, vector<2x16x64xbf16>
    %13 = vector.shape_cast %12 : vector<2x16x64xbf16> to vector<32x64xbf16>
    %c1_12 = arith.constant 1 : index
    %c0_13 = arith.constant 0 : index
    %c0_14 = arith.constant 0 : index
    %14 = vector.load %arg3[%c1_12, %c0_13, %c0_14] : memref<2x64x128xbf16, #tpu.memory_space<vmem>>, vector<1x64x128xbf16>
    %15 = vector.shape_cast %14 : vector<1x64x128xbf16> to vector<64x128xbf16>
    %cst_15 = arith.constant dense<0.000000e+00> : vector<32x128xf32>
    %16 = tpu.matmul %13, %15, %cst_15 {dimension_numbers = #tpu.dot_dimension_numbers<[1], [0], [0], [1], [0, 0, 1, 1], [], []>} : vector<32x64xbf16>, vector<64x128xbf16>, vector<32x128xf32> -> vector<32x128xf32>
    %17 = arith.addf %11, %16 : vector<32x128xf32>
    %c0_16 = arith.constant 0 : index
    %c0_17 = arith.constant 0 : index
    %18 = vector.load %arg4[%c0_16, %c0_17] : memref<1x128xf32, #tpu.memory_space<vmem>>, vector<1x128xf32>
    %19 = vector.broadcast %18 : vector<1x128xf32> to vector<32x128xf32>
    %20 = arith.addf %17, %19 : vector<32x128xf32>
    %cst_18 = arith.constant 0.000000e+00 : f32
    %21 = vector.broadcast %cst_18 : f32 to vector<32x128xf32>
    %22 = arith.maximumf %20, %21 : vector<32x128xf32>
    %c0_i32 = arith.constant 0 : i32
    %23 = arith.cmpi eq, %arg0, %c0_i32 : i32
    %24 = arith.extui %23 : i1 to i32
    %c0_i32_19 = arith.constant 0 : i32
    %25 = arith.cmpi ne, %24, %c0_i32_19 : i32
    scf.if %25 {
      %cst_47 = arith.constant 0.000000e+00 : bf16
      %54 = vector.broadcast %cst_47 : bf16 to vector<2x1x128xbf16>
      %c0_48 = arith.constant 0 : index
      %c15_49 = arith.constant 15 : index
      %c0_50 = arith.constant 0 : index
      %55 = vector.load %arg8[%c0_48, %c15_49, %c0_50] : memref<2x33x128xbf16, #tpu.memory_space<vmem>>, vector<2x1x128xbf16>
      tpu.vector_store %arg8[%c0_48, %c15_49, %c0_50], %54 {strides = array<i32>} : memref<2x33x128xbf16, #tpu.memory_space<vmem>>, vector<2x1x128xbf16>,
      %c0_51 = arith.constant 0 : index
      %c32 = arith.constant 32 : index
      %c0_52 = arith.constant 0 : index
      %56 = vector.load %arg8[%c0_51, %c32, %c0_52] : memref<2x33x128xbf16, #tpu.memory_space<vmem>>, vector<2x1x128xbf16>
      tpu.vector_store %arg8[%c0_51, %c32, %c0_52], %54 {strides = array<i32>} : memref<2x33x128xbf16, #tpu.memory_space<vmem>>, vector<2x1x128xbf16>,
    } else {
    }
    %26 = vector.shape_cast %22 : vector<32x128xf32> to vector<2x16x128xf32>
    %27 = arith.truncf %26 : vector<2x16x128xf32> to vector<2x16x128xbf16>
    %c0_20 = arith.constant 0 : index
    %c16 = arith.constant 16 : index
    %c0_21 = arith.constant 0 : index
    %28 = vector.load %arg8[%c0_20, %c16, %c0_21] : memref<2x33x128xbf16, #tpu.memory_space<vmem>>, vector<2x16x128xbf16>
    tpu.vector_store %arg8[%c0_20, %c16, %c0_21], %27 {strides = array<i32>} : memref<2x33x128xbf16, #tpu.memory_space<vmem>>, vector<2x16x128xbf16>,
    %c0_22 = arith.constant 0 : index
    %c16_23 = arith.constant 16 : index
    %c0_24 = arith.constant 0 : index
    %29 = vector.load %arg8[%c0_22, %c16_23, %c0_24] : memref<2x33x128xbf16, #tpu.memory_space<vmem>>, vector<2x16x128xbf16>
    %30 = vector.shape_cast %29 : vector<2x16x128xbf16> to vector<32x128xbf16>
    %c1_25 = arith.constant 1 : index
    %c0_26 = arith.constant 0 : index
    %c0_27 = arith.constant 0 : index
    %31 = vector.load %arg5[%c1_25, %c0_26, %c0_27] : memref<3x128x128xbf16, #tpu.memory_space<vmem>>, vector<1x128x128xbf16>
    %32 = vector.shape_cast %31 : vector<1x128x128xbf16> to vector<128x128xbf16>
    %cst_28 = arith.constant dense<0.000000e+00> : vector<32x128xf32>
    %33 = tpu.matmul %30, %32, %cst_28 {dimension_numbers = #tpu.dot_dimension_numbers<[1], [0], [0], [1], [0, 0, 1, 1], [], []>} : vector<32x128xbf16>, vector<128x128xbf16>, vector<32x128xf32> -> vector<32x128xf32>
    %c0_29 = arith.constant 0 : index
    %c15 = arith.constant 15 : index
    %c0_30 = arith.constant 0 : index
    %34 = vector.load %arg8[%c0_29, %c15, %c0_30] : memref<2x33x128xbf16, #tpu.memory_space<vmem>>, vector<2x16x128xbf16>
    %35 = vector.shape_cast %34 : vector<2x16x128xbf16> to vector<32x128xbf16>
    %c0_31 = arith.constant 0 : index
    %c0_32 = arith.constant 0 : index
    %c0_33 = arith.constant 0 : index
    %36 = vector.load %arg5[%c0_31, %c0_32, %c0_33] : memref<3x128x128xbf16, #tpu.memory_space<vmem>>, vector<1x128x128xbf16>
    %37 = vector.shape_cast %36 : vector<1x128x128xbf16> to vector<128x128xbf16>
    %cst_34 = arith.constant dense<0.000000e+00> : vector<32x128xf32>
    %38 = tpu.matmul %35, %37, %cst_34 {dimension_numbers = #tpu.dot_dimension_numbers<[1], [0], [0], [1], [0, 0, 1, 1], [], []>} : vector<32x128xbf16>, vector<128x128xbf16>, vector<32x128xf32> -> vector<32x128xf32>
    %39 = arith.addf %33, %38 : vector<32x128xf32>
    %c0_35 = arith.constant 0 : index
    %c17 = arith.constant 17 : index
    %c0_36 = arith.constant 0 : index
    %40 = vector.load %arg8[%c0_35, %c17, %c0_36] : memref<2x33x128xbf16, #tpu.memory_space<vmem>>, vector<2x16x128xbf16>
    %41 = vector.shape_cast %40 : vector<2x16x128xbf16> to vector<32x128xbf16>
    %c2_37 = arith.constant 2 : index
    %c0_38 = arith.constant 0 : index
    %c0_39 = arith.constant 0 : index
    %42 = vector.load %arg5[%c2_37, %c0_38, %c0_39] : memref<3x128x128xbf16, #tpu.memory_space<vmem>>, vector<1x128x128xbf16>
    %43 = vector.shape_cast %42 : vector<1x128x128xbf16> to vector<128x128xbf16>
    %cst_40 = arith.constant dense<0.000000e+00> : vector<32x128xf32>
    %44 = tpu.matmul %41, %43, %cst_40 {dimension_numbers = #tpu.dot_dimension_numbers<[1], [0], [0], [1], [0, 0, 1, 1], [], []>} : vector<32x128xbf16>, vector<128x128xbf16>, vector<32x128xf32> -> vector<32x128xf32>
    %45 = arith.addf %39, %44 : vector<32x128xf32>
    %46 = arith.addf %45, %5 : vector<32x128xf32>
    %c0_41 = arith.constant 0 : index
    %c0_42 = arith.constant 0 : index
    %47 = vector.load %arg6[%c0_41, %c0_42] : memref<1x128xf32, #tpu.memory_space<vmem>>, vector<1x128xf32>
    %48 = vector.broadcast %47 : vector<1x128xf32> to vector<32x128xf32>
    %49 = arith.addf %46, %48 : vector<32x128xf32>
    %cst_43 = arith.constant 0.000000e+00 : f32
    %50 = vector.broadcast %cst_43 : f32 to vector<32x128xf32>
    %51 = arith.maximumf %49, %50 : vector<32x128xf32>
    %52 = vector.shape_cast %51 : vector<32x128xf32> to vector<2x16x128xf32>
    %c0_44 = arith.constant 0 : index
    %c0_45 = arith.constant 0 : index
    %c0_46 = arith.constant 0 : index
    %53 = vector.load %arg7[%c0_44, %c0_45, %c0_46] : memref<2x16x128xf32, #tpu.memory_space<vmem>>, vector<2x16x128xf32>
    tpu.vector_store %arg7[%c0_44, %c0_45, %c0_46], %52 {strides = array<i32>} : memref<2x16x128xf32, #tpu.memory_space<vmem>>, vector<2x16x128xf32>,
    return
  }
  func.func @transform_0(%arg0: i32) -> (i32, i32, i32) {
    %c0_i32 = arith.constant 0 : i32
    %c0_i32_0 = arith.constant 0 : i32
    %c0_i32_1 = arith.constant 0 : i32
    return %arg0, %c0_i32, %c0_i32_0 : i32, i32, i32
  }
  func.func @transform_1(%arg0: i32) -> (i32, i32) {
    %c0_i32 = arith.constant 0 : i32
    %c0_i32_0 = arith.constant 0 : i32
    %c0_i32_1 = arith.constant 0 : i32
    return %c0_i32, %c0_i32_0 : i32, i32
  }
  func.func @transform_2(%arg0: i32) -> (i32, i32, i32) {
    %c0_i32 = arith.constant 0 : i32
    %c0_i32_0 = arith.constant 0 : i32
    %c0_i32_1 = arith.constant 0 : i32
    %c0_i32_2 = arith.constant 0 : i32
    return %c0_i32, %c0_i32_0, %c0_i32_1 : i32, i32, i32
  }
  func.func @transform_3(%arg0: i32) -> (i32, i32) {
    %c0_i32 = arith.constant 0 : i32
    %c0_i32_0 = arith.constant 0 : i32
    %c0_i32_1 = arith.constant 0 : i32
    return %c0_i32, %c0_i32_0 : i32, i32
  }
  func.func @transform_4(%arg0: i32) -> (i32, i32, i32) {
    %c0_i32 = arith.constant 0 : i32
    %c0_i32_0 = arith.constant 0 : i32
    %c0_i32_1 = arith.constant 0 : i32
    %c0_i32_2 = arith.constant 0 : i32
    return %c0_i32, %c0_i32_0, %c0_i32_1 : i32, i32, i32
  }
  func.func @transform_5(%arg0: i32) -> (i32, i32) {
    %c0_i32 = arith.constant 0 : i32
    %c0_i32_0 = arith.constant 0 : i32
    %c0_i32_1 = arith.constant 0 : i32
    return %c0_i32, %c0_i32_0 : i32, i32
  }
  func.func @transform_6(%arg0: i32) -> (i32, i32, i32) {
    %c0_i32 = arith.constant 0 : i32
    %c0_i32_0 = arith.constant 0 : i32
    %c0_i32_1 = arith.constant 0 : i32
    return %arg0, %c0_i32, %c0_i32_0 : i32, i32, i32
  }
}

</mosaic_0001>

<llo_original>
// kernel: tpu_custom_call.1
$region0: #{tpu_custom_call.1}
  #allocation0 [shape = 'u32[]', space=smem, size = 0x4, offset = 0x4, fixed_abs, tag = 'smem constant byte address 0x4 - core index']
  #allocation1 [shape = 'u32[144,128]{1,0:T(1,128)}', space=vmem, size = 0x12000, scoped, tag = 'internal scratch']
  #allocation2 [shape = 'bf16[2,33,128]{2,1,0:T(8,128)(2,1)}', space=vmem, size = 0x5000, scoped, tag = 'scratch operand']
  %s0 = inlined_call_operand.vmem [shape: bf16[2,18,64], index: 0, kind: input, shape index: {}]
  %s1 = inlined_call_operand.hbm [shape: bf16[64,256], index: 1, kind: input, shape index: {}]
  %s2 = inlined_call_operand.hbm [shape: bf16[2,64,128], index: 2, kind: input, shape index: {}]
  %s3 = inlined_call_operand.vmem [shape: f32[1,128], index: 3, kind: input, shape index: {}]
  %s4 = inlined_call_operand.hbm [shape: bf16[3,128,128], index: 4, kind: input, shape index: {}]
  %s5 = inlined_call_operand.vmem [shape: f32[1,128], index: 5, kind: input, shape index: {}]
  %s6 = inlined_call_operand.hbm [shape: f32[2,16,128], index: 6, kind: output, shape index: {}]
  %s7 = sld [smem:[#allocation0]]
  $region50: #{tpu_custom_call.1} parent=0
    _
  %s9 = ssub.s32 1, %s7
  %s10 = scalar_select 0, %s9, %s7
  $region1: #{tpu_custom_call.1} parent=0
    #allocation3 [shape = 'u8[32768]{0}', space=vmem, size = 0x8000, scoped, tag = 'input window, operand 1, single buffered']
    #allocation4 [shape = 's32[1]{0}', space=sflag, size = 0x4, scoped, tag = 'scoped memory for tpu_custom_call.1']
    #allocation5 [shape = 's32[1]{0}', space=sflag, size = 0x4, scoped, tag = 'scoped memory for tpu_custom_call.1']
    #allocation6 [shape = 'u8[32768]{0}', space=vmem, size = 0x8000, scoped, tag = 'input window, operand 2, single buffered']
    #allocation7 [shape = 's32[1]{0}', space=sflag, size = 0x4, scoped, tag = 'scoped memory for tpu_custom_call.1']
    #allocation8 [shape = 'u8[98304]{0}', space=vmem, size = 0x18000, scoped, tag = 'input window, operand 4, single buffered']
    #allocation9 [shape = 'u8[16384]{0}', space=vmem, size = 0x4000, scoped, tag = 'output window, operand 0, single buffered']
    %11 = vsyncpa [#allocation4], 0
    %12 = vsyncpa [#allocation7], 0
    %13 = vsyncpa [#allocation5], 0
    // Predicated region
    $region2: #{tpu_custom_call.1} parent=1 // pred_check
      _
    $region3: #{tpu_custom_call.1} parent=1 // pred_check_branch
      %15 = sbr.rel (0) target = $region5
    $region4: #{tpu_custom_call.1} parent=1 // pred_region
      _
    $region5: #{tpu_custom_call.1} parent=1 // pred_fallthru
      _
    // Predicated region
    $region6: #{tpu_custom_call.1} parent=1 // pred_check
      _
    $region7: #{tpu_custom_call.1} parent=1 // pred_check_branch
      %17 = sbr.rel (0) target = $region9
    $region8: #{tpu_custom_call.1} parent=1 // pred_region
      %s19 = ssub.s32 1024, 1024
      %20 = vsyncadd [#allocation4], %s19
      %s21 = sshll.u32 [#allocation3], 4
      %s22 = int_to_ptr.vmem [resolvable:$true] %s21
      %27 = dma.hbm_to_vmem [thread:$0]  %s1, 1024, %s22, [#allocation4], 128, 128, 8
    $region9: #{tpu_custom_call.1} parent=1 // pred_fallthru
      _
    // Predicated region
    $region10: #{tpu_custom_call.1} parent=1 // pred_check
      _
    $region11: #{tpu_custom_call.1} parent=1 // pred_check_branch
      %29 = sbr.rel (0) target = $region13
    $region12: #{tpu_custom_call.1} parent=1 // pred_region
      %s31 = ssub.s32 1024, 1024
      %32 = vsyncadd [#allocation7], %s31
      %s33 = sshll.u32 [#allocation6], 4
      %s34 = int_to_ptr.vmem [resolvable:$true] %s33
      %39 = dma.hbm_to_vmem [thread:$0]  %s2, 1024, %s34, [#allocation7], 64, 64, 4
    $region13: #{tpu_custom_call.1} parent=1 // pred_fallthru
      _
    // Predicated region
    $region14: #{tpu_custom_call.1} parent=1 // pred_check
      _
    $region15: #{tpu_custom_call.1} parent=1 // pred_check_branch
      %41 = sbr.rel (0) target = $region17
    $region16: #{tpu_custom_call.1} parent=1 // pred_region
      _
    $region17: #{tpu_custom_call.1} parent=1 // pred_fallthru
      _
    // Predicated region
    $region18: #{tpu_custom_call.1} parent=1 // pred_check
      _
    $region19: #{tpu_custom_call.1} parent=1 // pred_check_branch
      %43 = sbr.rel (0) target = $region21
    $region20: #{tpu_custom_call.1} parent=1 // pred_region
      %s45 = ssub.s32 3072, 3072
      %46 = vsyncadd [#allocation7], %s45
      %s47 = sshll.u32 [#allocation8], 4
      %s48 = int_to_ptr.vmem [resolvable:$true] %s47
      %53 = dma.hbm_to_vmem [thread:$0]  %s4, 3072, %s48, [#allocation7], 64, 64, 4
    $region21: #{tpu_custom_call.1} parent=1 // pred_fallthru
      _
    // Predicated region
    $region22: #{tpu_custom_call.1} parent=1 // pred_check
      _
    $region23: #{tpu_custom_call.1} parent=1 // pred_check_branch
      %55 = sbr.rel (0) target = $region25
    $region24: #{tpu_custom_call.1} parent=1 // pred_region
      _
    $region25: #{tpu_custom_call.1} parent=1 // pred_fallthru
      _
    // Predicated region
    $region26: #{tpu_custom_call.1} parent=1 // pred_check
      _
    $region27: #{tpu_custom_call.1} parent=1 // pred_check_branch
      %57 = sbr.rel (0) target = $region29
    $region28: #{tpu_custom_call.1} parent=1 // pred_region
      %58 = dma.done [#allocation4], 1024
    $region29: #{tpu_custom_call.1} parent=1 // pred_fallthru
      _
    // Predicated region
    $region30: #{tpu_custom_call.1} parent=1 // pred_check
      _
    $region31: #{tpu_custom_call.1} parent=1 // pred_check_branch
      %60 = sbr.rel (0) target = $region33
    $region32: #{tpu_custom_call.1} parent=1 // pred_region
      %61 = dma.done [#allocation7], 1024
    $region33: #{tpu_custom_call.1} parent=1 // pred_fallthru
      _
    // Predicated region
    $region34: #{tpu_custom_call.1} parent=1 // pred_check
      _
    $region35: #{tpu_custom_call.1} parent=1 // pred_check_branch
      %63 = sbr.rel (0) target = $region37
    $region36: #{tpu_custom_call.1} parent=1 // pred_region
      %64 = dma.done [#allocation7], 3072
    $region37: #{tpu_custom_call.1} parent=1 // pred_fallthru
      _
    %v66 = vld [vmem:[%s0] sm:$0xf]
    %v67 = vld [vmem:[%s0 + $0x4] sm:$0xf]
    %v68 = vld [vmem:[%s0 + $0x8] sm:$0x1]
    %v69 = vld [vmem:[%s0 + $0xc] sm:$0xf]
    %v70 = vld [vmem:[%s0 + $0x10] sm:$0xf]
    %v71 = vld [vmem:[%s0 + $0x14] sm:$0x1]
    %vm72 = vsmask.f32 3328
    %vm73 = vsmask.f32 7440
    %vm74 = vmor %vm72, %vm73
    %v76 = vshrl.u32 %v66, 16
    %v78 = vrot.slane %v76, 4
    %v79 = vshll.u32 %v66, 16
    %v81 = vrot.slane %v79, 5
    %v82 = vor.u32 %v78, %v81
    %v83 = vrot.slane %v82, 4
    %v85 = vshll.u32 %v67, 16
    %v87 = vrot.slane %v85, 5
    %v88 = vsel %vm74, %v83, %v87
    %v89 = vshrl.u32 %v67, 16
    %v91 = vrot.slane %v89, 4
    %v92 = vor.u32 %v91, %v87
    %v93 = vrot.slane %v92, 4
    %v95 = vshll.u32 %v68, 16
    %v97 = vrot.slane %v95, 5
    %v98 = vsel %vm74, %v93, %v97
    %v100 = vshrl.u32 %v69, 16
    %v102 = vrot.slane %v100, 4
    %v103 = vshll.u32 %v69, 16
    %v105 = vrot.slane %v103, 5
    %v106 = vor.u32 %v102, %v105
    %v107 = vrot.slane %v106, 4
    %v109 = vshll.u32 %v70, 16
    %v111 = vrot.slane %v109, 5
    %v112 = vsel %vm74, %v107, %v111
    %v113 = vshrl.u32 %v70, 16
    %v115 = vrot.slane %v113, 4
    %v116 = vor.u32 %v115, %v111
    %v117 = vrot.slane %v116, 4
    %v119 = vshll.u32 %v71, 16
    %v121 = vrot.slane %v119, 5
    %v122 = vsel %vm74, %v117, %v121
    %v123 = vld [vmem:[#allocation3] sm:$0xff]
    %v124 = vld [vmem:[#allocation3 + $0x8] sm:$0xff]
    %v125 = vld [vmem:[#allocation3 + $0x10] sm:$0xff]
    %v126 = vld [vmem:[#allocation3 + $0x18] sm:$0xff]
    %v127 = vld [vmem:[#allocation3 + $0x20] sm:$0xff]
    %v128 = vld [vmem:[#allocation3 + $0x28] sm:$0xff]
    %v129 = vld [vmem:[#allocation3 + $0x30] sm:$0xff]
    %v130 = vld [vmem:[#allocation3 + $0x38] sm:$0xff]
    %v131 = vunpack.c.l.b16 %v88
    %v132 = vunpack.c.l.b16 %v98
    %v133 = vunpack.c.l.b16 %v112
    %v134 = vunpack.c.l.b16 %v122
    %v135 = vpack.c.b16 %v132, %v131
    %v136 = vpack.c.b16 %v134, %v133
    %v145 = vunpack.c.l.b16 %v123
    %v146 = vunpack.c.h.b16 %v123
    %v147 = vunpack.c.l.b16 %v124
    %v148 = vunpack.c.h.b16 %v124
    %v149 = vunpack.c.l.b16 %v125
    %v150 = vunpack.c.h.b16 %v125
    %v151 = vunpack.c.l.b16 %v126
    %v152 = vunpack.c.h.b16 %v126
    %v153 = vunpack.c.l.b16 %v127
    %v154 = vunpack.c.h.b16 %v127
    %v155 = vunpack.c.l.b16 %v128
    %v156 = vunpack.c.h.b16 %v128
    %v157 = vunpack.c.l.b16 %v129
    %v158 = vunpack.c.h.b16 %v129
    %v159 = vunpack.c.l.b16 %v130
    %v160 = vunpack.c.h.b16 %v130
    %v161 = vpack.c.b16 %v147, %v145
    %v162 = vpack.c.b16 %v148, %v146
    %v163 = vpack.c.b16 %v151, %v149
    %v164 = vpack.c.b16 %v152, %v150
    %v165 = vpack.c.b16 %v155, %v153
    %v166 = vpack.c.b16 %v156, %v154
    %v167 = vpack.c.b16 %v159, %v157
    %v168 = vpack.c.b16 %v160, %v158
    %vm177 = vcmask 523264
    %v179 = vsel %vm177, %v135, 0
    %v182 = vsel %vm177, %v136, 0
    %184 = vmatprep.subr.bf16.mxu0 %v162
    %185 = vmatpush1.bf16.msra.mxu0 %v161
    %186 = vmatprep.subr.bf16.mxu0 %v164
    %187 = vmatpush1.bf16.msra.mxu0 %v163
    %188 = vmatprep.subr.bf16.mxu0 %v166
    %189 = vmatpush1.bf16.msra.mxu0 %v165
    %190 = vmatprep.subr.bf16.mxu0 %v168
    %191 = vmatpush1.bf16.msra.mxu0 %v167
    %192 = vmatprep.subr.bf16.mxu0 0
    %193 = vmatpush1.bf16.msra.mxu0 0
    %194 = vmatprep.subr.bf16.mxu0 0
    %195 = vmatpush1.bf16.msra.mxu0 0
    %196 = vmatprep.subr.bf16.mxu0 0
    %197 = vmatpush1.bf16.msra.mxu0 0
    %198 = vmatprep.subr.bf16.mxu0 0
    %199 = vmatpush1.bf16.msra.mxu0 0
    %200 = vmatprep.subr.bf16.mxu0 0
    %201 = vmatpush1.bf16.msra.mxu0 0
    %202 = vmatprep.subr.bf16.mxu0 0
    %203 = vmatpush1.bf16.msra.mxu0 0
    %204 = vmatprep.subr.bf16.mxu0 0
    %205 = vmatpush1.bf16.msra.mxu0 0
    %206 = vmatprep.subr.bf16.mxu0 0
    %207 = vmatpush1.bf16.msra.mxu0 0
    %208 = vmatprep.subr.bf16.mxu0 0
    %209 = vmatpush1.bf16.msra.mxu0 0
    %210 = vmatprep.subr.bf16.mxu0 0
    %211 = vmatpush1.bf16.msra.mxu0 0
    %212 = vmatprep.subr.bf16.mxu0 0
    %213 = vmatpush1.bf16.msra.mxu0 0
    %214 = vmatprep.subr.bf16.mxu0 0
    %215 = vmatpush1.bf16.msra.mxu0 0
    %216 = vmatprep.mubr.bf16.mxu0 0
    %217 = vmatmul.mubr.bf16.gmra.mrb[0].mxu0 %v179
    %v218 = vpop.f32.mrb[0].mxu0
    %v219 = vadd.f32 0.0, %v218
    %v220 = vpop.f32.mrb[0].mxu0
    %v221 = vadd.f32 0.0, %v220
    %v222 = vpop.f32.mrb[0].mxu0
    %v223 = vadd.f32 0.0, %v222
    %v224 = vpop.f32.mrb[0].mxu0
    %v225 = vadd.f32 0.0, %v224
    %226 = vmatprep.mubr.bf16.mxu0 0
    %227 = vmatmul.mubr.bf16.gmra.mrb[0].mxu0 %v182
    %v228 = vpop.f32.mrb[0].mxu0
    %v229 = vadd.f32 0.0, %v228
    %v230 = vpop.f32.mrb[0].mxu0
    %v231 = vadd.f32 0.0, %v230
    %v232 = vpop.f32.mrb[0].mxu0
    %v233 = vadd.f32 0.0, %v232
    %v234 = vpop.f32.mrb[0].mxu0
    %v235 = vadd.f32 0.0, %v234
    %236 = vdwg.mxu0
    %v237 = vld [vmem:[%s0] sm:$0xf]
    %v238 = vld [vmem:[%s0 + $0x4] sm:$0xf]
    %v239 = vld [vmem:[%s0 + $0xc] sm:$0xf]
    %v240 = vld [vmem:[%s0 + $0x10] sm:$0xf]
    %v241 = vld [vmem:[#allocation6] sm:$0xf]
    %v242 = vld [vmem:[#allocation6 + $0x4] sm:$0xf]
    %v243 = vld [vmem:[#allocation6 + $0x8] sm:$0xf]
    %v244 = vld [vmem:[#allocation6 + $0xc] sm:$0xf]
    %v245 = vld [vmem:[#allocation6 + $0x10] sm:$0xf]
    %v246 = vld [vmem:[#allocation6 + $0x14] sm:$0xf]
    %v247 = vld [vmem:[#allocation6 + $0x18] sm:$0xf]
    %v248 = vld [vmem:[#allocation6 + $0x1c] sm:$0xf]
    %v253 = vunpack.c.l.b16 %v237
    %v254 = vunpack.c.l.b16 %v238
    %v255 = vunpack.c.l.b16 %v239
    %v256 = vunpack.c.l.b16 %v240
    %v257 = vpack.c.b16 %v254, %v253
    %v258 = vpack.c.b16 %v256, %v255
    %v267 = vunpack.c.l.b16 %v241
    %v268 = vunpack.c.l.b16 %v242
    %v269 = vunpack.c.l.b16 %v243
    %v270 = vunpack.c.l.b16 %v244
    %v271 = vunpack.c.l.b16 %v245
    %v272 = vunpack.c.l.b16 %v246
    %v273 = vunpack.c.l.b16 %v247
    %v274 = vunpack.c.l.b16 %v248
    %v275 = vpack.c.b16 %v268, %v267
    %v276 = vpack.c.b16 %v270, %v269
    %v277 = vpack.c.b16 %v272, %v271
    %v278 = vpack.c.b16 %v274, %v273
    %v284 = vsel %vm177, %v257, 0
    %v287 = vsel %vm177, %v258, 0
    %289 = vmatprep.subr.bf16.mxu0 0
    %290 = vmatpush1.bf16.msra.mxu0 %v275
    %291 = vmatprep.subr.bf16.mxu0 0
    %292 = vmatpush1.bf16.msra.mxu0 %v276
    %293 = vmatprep.subr.bf16.mxu0 0
    %294 = vmatpush1.bf16.msra.mxu0 %v277
    %295 = vmatprep.subr.bf16.mxu0 0
    %296 = vmatpush1.bf16.msra.mxu0 %v278
    %297 = vmatprep.subr.bf16.mxu0 0
    %298 = vmatpush1.bf16.msra.mxu0 0
    %299 = vmatprep.subr.bf16.mxu0 0
    %300 = vmatpush1.bf16.msra.mxu0 0
    %301 = vmatprep.subr.bf16.mxu0 0
    %302 = vmatpush1.bf16.msra.mxu0 0
    %303 = vmatprep.subr.bf16.mxu0 0
    %304 = vmatpush1.bf16.msra.mxu0 0
    %305 = vmatprep.subr.bf16.mxu0 0
    %306 = vmatpush1.bf16.msra.mxu0 0
    %307 = vmatprep.subr.bf16.mxu0 0
    %308 = vmatpush1.bf16.msra.mxu0 0
    %309 = vmatprep.subr.bf16.mxu0 0
    %310 = vmatpush1.bf16.msra.mxu0 0
    %311 = vmatprep.subr.bf16.mxu0 0
    %312 = vmatpush1.bf16.msra.mxu0 0
    %313 = vmatprep.subr.bf16.mxu0 0
    %314 = vmatpush1.bf16.msra.mxu0 0
    %315 = vmatprep.subr.bf16.mxu0 0
    %316 = vmatpush1.bf16.msra.mxu0 0
    %317 = vmatprep.subr.bf16.mxu0 0
    %318 = vmatpush1.bf16.msra.mxu0 0
    %319 = vmatprep.subr.bf16.mxu0 0
    %320 = vmatpush1.bf16.msra.mxu0 0
    %321 = vmatprep.mubr.bf16.mxu0 0
    %322 = vmatmul.mubr.bf16.gmra.mrb[0].mxu0 %v284
    %v323 = vpop.f32.mrb[0].mxu0
    %v324 = vadd.f32 0.0, %v323
    %v325 = vpop.f32.mrb[0].mxu0
    %v326 = vpop.f32.mrb[0].mxu0
    %v327 = vadd.f32 0.0, %v326
    %v328 = vpop.f32.mrb[0].mxu0
    %329 = vmatprep.mubr.bf16.mxu0 0
    %330 = vmatmul.mubr.bf16.gmra.mrb[0].mxu0 %v287
    %v331 = vpop.f32.mrb[0].mxu0
    %v332 = vadd.f32 0.0, %v331
    %v333 = vpop.f32.mrb[0].mxu0
    %v334 = vpop.f32.mrb[0].mxu0
    %v335 = vadd.f32 0.0, %v334
    %v336 = vpop.f32.mrb[0].mxu0
    %337 = vdwg.mxu0
    %v338 = vadd.f32 %v219, %v324
    %v339 = vadd.f32 %v223, %v327
    %v340 = vadd.f32 %v229, %v332
    %v341 = vadd.f32 %v233, %v335
    %v342 = vld [vmem:[%s0] sm:$0xe]
    %v343 = vld [vmem:[%s0 + $0xc] sm:$0xe]
    %vm350 = vcmask 1042432
    %vm351 = vcmask 1046532
    %vm352 = vmor %vm350, %vm351
    %v353 = vrot.slane %v342, 5
    %v354 = vrot.slane %v353, 4
    %v355 = vrot.slane %v67, 5
    %v356 = vsel %vm352, %v354, %v355
    %v357 = vrot.slane %v355, 4
    %v358 = vrot.slane %v68, 5
    %v359 = vsel %vm352, %v357, %v358
    %v360 = vrot.slane %v343, 5
    %v361 = vrot.slane %v360, 4
    %v362 = vrot.slane %v70, 5
    %v363 = vsel %vm352, %v361, %v362
    %v364 = vrot.slane %v362, 4
    %v365 = vrot.slane %v71, 5
    %v366 = vsel %vm352, %v364, %v365
    %s367 = scalar_lea.vmem [#allocation6], 32
    %v368 = vld [vmem:[%s367] sm:$0xf]
    %v369 = vld [vmem:[%s367 + $0x4] sm:$0xf]
    %v370 = vld [vmem:[%s367 + $0x8] sm:$0xf]
    %v371 = vld [vmem:[%s367 + $0xc] sm:$0xf]
    %v372 = vld [vmem:[%s367 + $0x10] sm:$0xf]
    %v373 = vld [vmem:[%s367 + $0x14] sm:$0xf]
    %v374 = vld [vmem:[%s367 + $0x18] sm:$0xf]
    %v375 = vld [vmem:[%s367 + $0x1c] sm:$0xf]
    %v376 = vunpack.c.l.b16 %v356
    %v377 = vunpack.c.l.b16 %v359
    %v378 = vunpack.c.l.b16 %v363
    %v379 = vunpack.c.l.b16 %v366
    %v380 = vpack.c.b16 %v377, %v376
    %v381 = vpack.c.b16 %v379, %v378
    %v390 = vunpack.c.l.b16 %v368
    %v391 = vunpack.c.l.b16 %v369
    %v392 = vunpack.c.l.b16 %v370
    %v393 = vunpack.c.l.b16 %v371
    %v394 = vunpack.c.l.b16 %v372
    %v395 = vunpack.c.l.b16 %v373
    %v396 = vunpack.c.l.b16 %v374
    %v397 = vunpack.c.l.b16 %v375
    %v398 = vpack.c.b16 %v391, %v390
    %v399 = vpack.c.b16 %v393, %v392
    %v400 = vpack.c.b16 %v395, %v394
    %v401 = vpack.c.b16 %v397, %v396
    %v407 = vsel %vm177, %v380, 0
    %v410 = vsel %vm177, %v381, 0
    %412 = vmatprep.subr.bf16.mxu0 0
    %413 = vmatpush1.bf16.msra.mxu0 %v398
    %414 = vmatprep.subr.bf16.mxu0 0
    %415 = vmatpush1.bf16.msra.mxu0 %v399
    %416 = vmatprep.subr.bf16.mxu0 0
    %417 = vmatpush1.bf16.msra.mxu0 %v400
    %418 = vmatprep.subr.bf16.mxu0 0
    %419 = vmatpush1.bf16.msra.mxu0 %v401
    %420 = vmatprep.subr.bf16.mxu0 0
    %421 = vmatpush1.bf16.msra.mxu0 0
    %422 = vmatprep.subr.bf16.mxu0 0
    %423 = vmatpush1.bf16.msra.mxu0 0
    %424 = vmatprep.subr.bf16.mxu0 0
    %425 = vmatpush1.bf16.msra.mxu0 0
    %426 = vmatprep.subr.bf16.mxu0 0
    %427 = vmatpush1.bf16.msra.mxu0 0
    %428 = vmatprep.subr.bf16.mxu0 0
    %429 = vmatpush1.bf16.msra.mxu0 0
    %430 = vmatprep.subr.bf16.mxu0 0
    %431 = vmatpush1.bf16.msra.mxu0 0
    %432 = vmatprep.subr.bf16.mxu0 0
    %433 = vmatpush1.bf16.msra.mxu0 0
    %434 = vmatprep.subr.bf16.mxu0 0
    %435 = vmatpush1.bf16.msra.mxu0 0
    %436 = vmatprep.subr.bf16.mxu0 0
    %437 = vmatpush1.bf16.msra.mxu0 0
    %438 = vmatprep.subr.bf16.mxu0 0
    %439 = vmatpush1.bf16.msra.mxu0 0
    %440 = vmatprep.subr.bf16.mxu0 0
    %441 = vmatpush1.bf16.msra.mxu0 0
    %442 = vmatprep.subr.bf16.mxu0 0
    %443 = vmatpush1.bf16.msra.mxu0 0
    %444 = vmatprep.mubr.bf16.mxu0 0
    %445 = vmatmul.mubr.bf16.gmra.mrb[0].mxu0 %v407
    %v446 = vpop.f32.mrb[0].mxu0
    %v447 = vadd.f32 0.0, %v446
    %v448 = vpop.f32.mrb[0].mxu0
    %v449 = vpop.f32.mrb[0].mxu0
    %v450 = vadd.f32 0.0, %v449
    %v451 = vpop.f32.mrb[0].mxu0
    %452 = vmatprep.mubr.bf16.mxu0 0
    %453 = vmatmul.mubr.bf16.gmra.mrb[0].mxu0 %v410
    %v454 = vpop.f32.mrb[0].mxu0
    %v455 = vadd.f32 0.0, %v454
    %v456 = vpop.f32.mrb[0].mxu0
    %v457 = vpop.f32.mrb[0].mxu0
    %v458 = vadd.f32 0.0, %v457
    %v459 = vpop.f32.mrb[0].mxu0
    %460 = vdwg.mxu0
    %v461 = vadd.f32 %v338, %v447
    %v462 = vadd.f32 %v339, %v450
    %v463 = vadd.f32 %v340, %v455
    %v464 = vadd.f32 %v341, %v458
    %v465 = vld [vmem:[%s3] sm:$0x1]
    %v467 = vlaneseq
    %v468 = vshrl.u32 %v467, 7
    %v469 = vsub.s32 0, %v468
    %v470 = vrot.slane %v465, %v469
    %v472 = vadd.f32 %v461, %v470
    %v473 = vadd.f32 %v462, %v470
    %v474 = vadd.f32 %v463, %v470
    %v475 = vadd.f32 %v464, %v470
    %v476 = vmax.f32 %v472, 0.0
    %v477 = vmax.f32 %v473, 0.0
    %v478 = vmax.f32 %v474, 0.0
    %v479 = vmax.f32 %v475, 0.0
    %p480 = scmp.eq.s32.totalorder 0, 0
    // Predicated region
    $region38: #{tpu_custom_call.1} parent=1 // pred_check
      %p481 = pneg %p480
    $region39: #{tpu_custom_call.1} parent=1 // pred_check_branch
      %483 = sbr.rel (%p481) target = $region41
    $region40: #{tpu_custom_call.1} parent=1 // pred_region
      %vm484 = vcmask 1043459
      %vm485 = vsmask.f32 7950
      %vm486 = vmand %vm484, %vm485
      %v487 = vld [vmem:[#allocation2 + $0x4] sm:$0x8]
      %v488 = vsel %vm486, 0, %v487
      %489 = vst [vmem:[#allocation2 + $0x4] sm:$0x8] %v488
      %v490 = vld [vmem:[#allocation2 + $0x18] sm:$0x8]
      %v491 = vsel %vm486, 0, %v490
      %492 = vst [vmem:[#allocation2 + $0x18] sm:$0x8] %v491
      %vm493 = vcmask 1040384
      %vm494 = vsmask.f32 256
      %vm495 = vmand %vm493, %vm494
      %v496 = vld [vmem:[#allocation2 + $0x10] sm:$0x1]
      %v497 = vsel %vm495, 0, %v496
      %498 = vst [vmem:[#allocation2 + $0x10] sm:$0x1] %v497
      %v499 = vld [vmem:[#allocation2 + $0x24] sm:$0x1]
      %v500 = vsel %vm495, 0, %v499
      %501 = vst [vmem:[#allocation2 + $0x24] sm:$0x1] %v500
    $region41: #{tpu_custom_call.1} parent=1 // pred_fallthru
      _
    %v502 = vpack.c.bf16 %v477, %v476
    %v503 = vpack.c.bf16 %v479, %v478
    %v506 = vunpack.c.l.b16 %v502
    %v507 = vunpack.c.h.b16 %v502
    %v508 = vunpack.c.l.b16 %v503
    %v509 = vunpack.c.h.b16 %v503
    %v510 = vpack.c.b16 %v506, %v506
    %v511 = vpack.c.b16 %v507, %v507
    %v512 = vpack.c.b16 %v508, %v508
    %v513 = vpack.c.b16 %v509, %v509
    %518 = vst [vmem:[#allocation2 + $0x8] sm:$0xf] %v510
    %519 = vst [vmem:[#allocation2 + $0xc] sm:$0xf] %v511
    %520 = vst [vmem:[#allocation2 + $0x1c] sm:$0xf] %v512
    %521 = vst [vmem:[#allocation2 + $0x20] sm:$0xf] %v513
    %v522 = vld [vmem:[#allocation2 + $0x8] sm:$0xf]
    %v523 = vld [vmem:[#allocation2 + $0xc] sm:$0xf]
    %v524 = vld [vmem:[#allocation2 + $0x1c] sm:$0xf]
    %v525 = vld [vmem:[#allocation2 + $0x20] sm:$0xf]
    %s526 = scalar_lea.vmem [#allocation8], 64
    %v527 = vld [vmem:[%s526] sm:$0xf]
    %v528 = vld [vmem:[%s526 + $0x4] sm:$0xf]
    %v529 = vld [vmem:[%s526 + $0x8] sm:$0xf]
    %v530 = vld [vmem:[%s526 + $0xc] sm:$0xf]
    %v531 = vld [vmem:[%s526 + $0x10] sm:$0xf]
    %v532 = vld [vmem:[%s526 + $0x14] sm:$0xf]
    %v533 = vld [vmem:[%s526 + $0x18] sm:$0xf]
    %v534 = vld [vmem:[%s526 + $0x1c] sm:$0xf]
    %v535 = vld [vmem:[%s526 + $0x20] sm:$0xf]
    %v536 = vld [vmem:[%s526 + $0x24] sm:$0xf]
    %v537 = vld [vmem:[%s526 + $0x28] sm:$0xf]
    %v538 = vld [vmem:[%s526 + $0x2c] sm:$0xf]
    %v539 = vld [vmem:[%s526 + $0x30] sm:$0xf]
    %v540 = vld [vmem:[%s526 + $0x34] sm:$0xf]
    %v541 = vld [vmem:[%s526 + $0x38] sm:$0xf]
    %v542 = vld [vmem:[%s526 + $0x3c] sm:$0xf]
    %v543 = vld [vmem:[#allocation2 + $0x4] sm:$0x8]
    %v544 = vld [vmem:[#allocation2 + $0x18] sm:$0x8]
    %vm545 = vsmask.f32 256
    %vm546 = vsmask.f32 4368
    %vm547 = vmor %vm545, %vm546
    %v549 = vshrl.u32 %v543, 16
    %v551 = vrot.slane %v549, 7
    %v552 = vrot.slane %v551, 4
    %v554 = vshrl.u32 %v522, 16
    %v556 = vrot.slane %v554, 7
    %v557 = vshll.u32 %v522, 16
    %v559 = vor.u32 %v556, %v557
    %v560 = vsel %vm547, %v552, %v559
    %v561 = vrot.slane %v556, 4
    %v563 = vshrl.u32 %v523, 16
    %v565 = vrot.slane %v563, 7
    %v566 = vshll.u32 %v523, 16
    %v568 = vor.u32 %v565, %v566
    %v569 = vsel %vm547, %v561, %v568
    %v571 = vshrl.u32 %v544, 16
    %v573 = vrot.slane %v571, 7
    %v574 = vrot.slane %v573, 4
    %v576 = vshrl.u32 %v524, 16
    %v578 = vrot.slane %v576, 7
    %v579 = vshll.u32 %v524, 16
    %v581 = vor.u32 %v578, %v579
    %v582 = vsel %vm547, %v574, %v581
    %v583 = vrot.slane %v578, 4
    %v585 = vshrl.u32 %v525, 16
    %v587 = vrot.slane %v585, 7
    %v588 = vshll.u32 %v525, 16
    %v590 = vor.u32 %v587, %v588
    %v591 = vsel %vm547, %v583, %v590
    %v592 = vld [vmem:[#allocation8] sm:$0xf]
    %v593 = vld [vmem:[#allocation8 + $0x4] sm:$0xf]
    %v594 = vld [vmem:[#allocation8 + $0x8] sm:$0xf]
    %v595 = vld [vmem:[#allocation8 + $0xc] sm:$0xf]
    %v596 = vld [vmem:[#allocation8 + $0x10] sm:$0xf]
    %v597 = vld [vmem:[#allocation8 + $0x14] sm:$0xf]
    %v598 = vld [vmem:[#allocation8 + $0x18] sm:$0xf]
    %v599 = vld [vmem:[#allocation8 + $0x1c] sm:$0xf]
    %v600 = vld [vmem:[#allocation8 + $0x20] sm:$0xf]
    %v601 = vld [vmem:[#allocation8 + $0x24] sm:$0xf]
    %v602 = vld [vmem:[#allocation8 + $0x28] sm:$0xf]
    %v603 = vld [vmem:[#allocation8 + $0x2c] sm:$0xf]
    %v604 = vld [vmem:[#allocation8 + $0x30] sm:$0xf]
    %v605 = vld [vmem:[#allocation8 + $0x34] sm:$0xf]
    %v606 = vld [vmem:[#allocation8 + $0x38] sm:$0xf]
    %v607 = vld [vmem:[#allocation8 + $0x3c] sm:$0xf]
    %v608 = vunpack.c.l.b16 %v560
    %v609 = vunpack.c.l.b16 %v569
    %v610 = vunpack.c.l.b16 %v582
    %v611 = vunpack.c.l.b16 %v591
    %v612 = vpack.c.b16 %v609, %v608
    %v613 = vpack.c.b16 %v611, %v610
    %v632 = vunpack.c.l.b16 %v592
    %v633 = vunpack.c.l.b16 %v593
    %v634 = vunpack.c.l.b16 %v594
    %v635 = vunpack.c.l.b16 %v595
    %v636 = vunpack.c.l.b16 %v596
    %v637 = vunpack.c.l.b16 %v597
    %v638 = vunpack.c.l.b16 %v598
    %v639 = vunpack.c.l.b16 %v599
    %v640 = vunpack.c.l.b16 %v600
    %v641 = vunpack.c.l.b16 %v601
    %v642 = vunpack.c.l.b16 %v602
    %v643 = vunpack.c.l.b16 %v603
    %v644 = vunpack.c.l.b16 %v604
    %v645 = vunpack.c.l.b16 %v605
    %v646 = vunpack.c.l.b16 %v606
    %v647 = vunpack.c.l.b16 %v607
    %v648 = vpack.c.b16 %v633, %v632
    %v649 = vpack.c.b16 %v635, %v634
    %v650 = vpack.c.b16 %v637, %v636
    %v651 = vpack.c.b16 %v639, %v638
    %v652 = vpack.c.b16 %v641, %v640
    %v653 = vpack.c.b16 %v643, %v642
    %v654 = vpack.c.b16 %v645, %v644
    %v655 = vpack.c.b16 %v647, %v646
    %664 = vmatprep.subr.bf16.mxu0 0
    %665 = vmatpush1.bf16.msra.mxu0 %v648
    %666 = vmatprep.subr.bf16.mxu0 0
    %667 = vmatpush1.bf16.msra.mxu0 %v649
    %668 = vmatprep.subr.bf16.mxu0 0
    %669 = vmatpush1.bf16.msra.mxu0 %v650
    %670 = vmatprep.subr.bf16.mxu0 0
    %671 = vmatpush1.bf16.msra.mxu0 %v651
    %672 = vmatprep.subr.bf16.mxu0 0
    %673 = vmatpush1.bf16.msra.mxu0 %v652
    %674 = vmatprep.subr.bf16.mxu0 0
    %675 = vmatpush1.bf16.msra.mxu0 %v653
    %676 = vmatprep.subr.bf16.mxu0 0
    %677 = vmatpush1.bf16.msra.mxu0 %v654
    %678 = vmatprep.subr.bf16.mxu0 0
    %679 = vmatpush1.bf16.msra.mxu0 %v655
    %680 = vmatprep.subr.bf16.mxu0 0
    %681 = vmatpush1.bf16.msra.mxu0 0
    %682 = vmatprep.subr.bf16.mxu0 0
    %683 = vmatpush1.bf16.msra.mxu0 0
    %684 = vmatprep.subr.bf16.mxu0 0
    %685 = vmatpush1.bf16.msra.mxu0 0
    %686 = vmatprep.subr.bf16.mxu0 0
    %687 = vmatpush1.bf16.msra.mxu0 0
    %688 = vmatprep.subr.bf16.mxu0 0
    %689 = vmatpush1.bf16.msra.mxu0 0
    %690 = vmatprep.subr.bf16.mxu0 0
    %691 = vmatpush1.bf16.msra.mxu0 0
    %692 = vmatprep.subr.bf16.mxu0 0
    %693 = vmatpush1.bf16.msra.mxu0 0
    %694 = vmatprep.subr.bf16.mxu0 0
    %695 = vmatpush1.bf16.msra.mxu0 0
    %696 = vmatprep.mubr.bf16.mxu0 0
    %697 = vmatmul.mubr.bf16.gmra.mrb[0].mxu0 %v612
    %v698 = vpop.f32.mrb[0].mxu0
    %v699 = vadd.f32 0.0, %v698
    %v700 = vpop.f32.mrb[0].mxu0
    %v701 = vpop.f32.mrb[0].mxu0
    %v702 = vadd.f32 0.0, %v701
    %v703 = vpop.f32.mrb[0].mxu0
    %704 = vmatprep.mubr.bf16.mxu0 0
    %705 = vmatmul.mubr.bf16.gmra.mrb[0].mxu0 %v613
    %v706 = vpop.f32.mrb[0].mxu0
    %v707 = vadd.f32 0.0, %v706
    %v708 = vpop.f32.mrb[0].mxu0
    %v709 = vpop.f32.mrb[0].mxu0
    %v710 = vadd.f32 0.0, %v709
    %v711 = vpop.f32.mrb[0].mxu0
    %712 = vdwg.mxu0
    %v717 = vunpack.c.l.b16 %v522
    %v718 = vunpack.c.l.b16 %v523
    %v719 = vunpack.c.l.b16 %v524
    %v720 = vunpack.c.l.b16 %v525
    %v721 = vpack.c.b16 %v718, %v717
    %v722 = vpack.c.b16 %v720, %v719
    %v741 = vunpack.c.l.b16 %v527
    %v742 = vunpack.c.l.b16 %v528
    %v743 = vunpack.c.l.b16 %v529
    %v744 = vunpack.c.l.b16 %v530
    %v745 = vunpack.c.l.b16 %v531
    %v746 = vunpack.c.l.b16 %v532
    %v747 = vunpack.c.l.b16 %v533
    %v748 = vunpack.c.l.b16 %v534
    %v749 = vunpack.c.l.b16 %v535
    %v750 = vunpack.c.l.b16 %v536
    %v751 = vunpack.c.l.b16 %v537
    %v752 = vunpack.c.l.b16 %v538
    %v753 = vunpack.c.l.b16 %v539
    %v754 = vunpack.c.l.b16 %v540
    %v755 = vunpack.c.l.b16 %v541
    %v756 = vunpack.c.l.b16 %v542
    %v757 = vpack.c.b16 %v742, %v741
    %v758 = vpack.c.b16 %v744, %v743
    %v759 = vpack.c.b16 %v746, %v745
    %v760 = vpack.c.b16 %v748, %v747
    %v761 = vpack.c.b16 %v750, %v749
    %v762 = vpack.c.b16 %v752, %v751
    %v763 = vpack.c.b16 %v754, %v753
    %v764 = vpack.c.b16 %v756, %v755
    %773 = vmatprep.subr.bf16.mxu0 0
    %774 = vmatpush1.bf16.msra.mxu0 %v757
    %775 = vmatprep.subr.bf16.mxu0 0
    %776 = vmatpush1.bf16.msra.mxu0 %v758
    %777 = vmatprep.subr.bf16.mxu0 0
    %778 = vmatpush1.bf16.msra.mxu0 %v759
    %779 = vmatprep.subr.bf16.mxu0 0
    %780 = vmatpush1.bf16.msra.mxu0 %v760
    %781 = vmatprep.subr.bf16.mxu0 0
    %782 = vmatpush1.bf16.msra.mxu0 %v761
    %783 = vmatprep.subr.bf16.mxu0 0
    %784 = vmatpush1.bf16.msra.mxu0 %v762
    %785 = vmatprep.subr.bf16.mxu0 0
    %786 = vmatpush1.bf16.msra.mxu0 %v763
    %787 = vmatprep.subr.bf16.mxu0 0
    %788 = vmatpush1.bf16.msra.mxu0 %v764
    %789 = vmatprep.subr.bf16.mxu0 0
    %790 = vmatpush1.bf16.msra.mxu0 0
    %791 = vmatprep.subr.bf16.mxu0 0
    %792 = vmatpush1.bf16.msra.mxu0 0
    %793 = vmatprep.subr.bf16.mxu0 0
    %794 = vmatpush1.bf16.msra.mxu0 0
    %795 = vmatprep.subr.bf16.mxu0 0
    %796 = vmatpush1.bf16.msra.mxu0 0
    %797 = vmatprep.subr.bf16.mxu0 0
    %798 = vmatpush1.bf16.msra.mxu0 0
    %799 = vmatprep.subr.bf16.mxu0 0
    %800 = vmatpush1.bf16.msra.mxu0 0
    %801 = vmatprep.subr.bf16.mxu0 0
    %802 = vmatpush1.bf16.msra.mxu0 0
    %803 = vmatprep.subr.bf16.mxu0 0
    %804 = vmatpush1.bf16.msra.mxu0 0
    %805 = vmatprep.mubr.bf16.mxu0 0
    %806 = vmatmul.mubr.bf16.gmra.mrb[0].mxu0 %v721
    %v807 = vpop.f32.mrb[0].mxu0
    %v808 = vadd.f32 %v699, %v807
    %v809 = vpop.f32.mrb[0].mxu0
    %v810 = vpop.f32.mrb[0].mxu0
    %v811 = vadd.f32 %v702, %v810
    %v812 = vpop.f32.mrb[0].mxu0
    %813 = vmatprep.mubr.bf16.mxu0 0
    %814 = vmatmul.mubr.bf16.gmra.mrb[0].mxu0 %v722
    %v815 = vpop.f32.mrb[0].mxu0
    %v816 = vadd.f32 %v707, %v815
    %v817 = vpop.f32.mrb[0].mxu0
    %v818 = vpop.f32.mrb[0].mxu0
    %v819 = vadd.f32 %v710, %v818
    %v820 = vpop.f32.mrb[0].mxu0
    %821 = vdwg.mxu0
    %v822 = vld [vmem:[#allocation2 + $0x8] sm:$0xf]
    %v823 = vld [vmem:[#allocation2 + $0xc] sm:$0xf]
    %v824 = vld [vmem:[#allocation2 + $0x10] sm:$0x1]
    %v825 = vld [vmem:[#allocation2 + $0x1c] sm:$0xf]
    %v826 = vld [vmem:[#allocation2 + $0x20] sm:$0xf]
    %v827 = vld [vmem:[#allocation2 + $0x24] sm:$0x1]
    %v829 = vshrl.u32 %v822, 16
    %v831 = vrot.slane %v829, 4
    %v832 = vshll.u32 %v822, 16
    %v834 = vrot.slane %v832, 5
    %v835 = vor.u32 %v831, %v834
    %v836 = vrot.slane %v835, 4
    %v838 = vshll.u32 %v823, 16
    %v840 = vrot.slane %v838, 5
    %v841 = vsel %vm74, %v836, %v840
    %v842 = vshrl.u32 %v823, 16
    %v844 = vrot.slane %v842, 4
    %v845 = vor.u32 %v844, %v840
    %v846 = vrot.slane %v845, 4
    %v848 = vshll.u32 %v824, 16
    %v850 = vrot.slane %v848, 5
    %v851 = vsel %vm74, %v846, %v850
    %v853 = vshrl.u32 %v825, 16
    %v855 = vrot.slane %v853, 4
    %v856 = vshll.u32 %v825, 16
    %v858 = vrot.slane %v856, 5
    %v859 = vor.u32 %v855, %v858
    %v860 = vrot.slane %v859, 4
    %v862 = vshll.u32 %v826, 16
    %v864 = vrot.slane %v862, 5
    %v865 = vsel %vm74, %v860, %v864
    %v866 = vshrl.u32 %v826, 16
    %v868 = vrot.slane %v866, 4
    %v869 = vor.u32 %v868, %v864
    %v870 = vrot.slane %v869, 4
    %v872 = vshll.u32 %v827, 16
    %v874 = vrot.slane %v872, 5
    %v875 = vsel %vm74, %v870, %v874
    %s876 = scalar_lea.vmem [#allocation8], 128
    %v877 = vld [vmem:[%s876] sm:$0xf]
    %v878 = vld [vmem:[%s876 + $0x4] sm:$0xf]
    %v879 = vld [vmem:[%s876 + $0x8] sm:$0xf]
    %v880 = vld [vmem:[%s876 + $0xc] sm:$0xf]
    %v881 = vld [vmem:[%s876 + $0x10] sm:$0xf]
    %v882 = vld [vmem:[%s876 + $0x14] sm:$0xf]
    %v883 = vld [vmem:[%s876 + $0x18] sm:$0xf]
    %v884 = vld [vmem:[%s876 + $0x1c] sm:$0xf]
    %v885 = vld [vmem:[%s876 + $0x20] sm:$0xf]
    %v886 = vld [vmem:[%s876 + $0x24] sm:$0xf]
    %v887 = vld [vmem:[%s876 + $0x28] sm:$0xf]
    %v888 = vld [vmem:[%s876 + $0x2c] sm:$0xf]
    %v889 = vld [vmem:[%s876 + $0x30] sm:$0xf]
    %v890 = vld [vmem:[%s876 + $0x34] sm:$0xf]
    %v891 = vld [vmem:[%s876 + $0x38] sm:$0xf]
    %v892 = vld [vmem:[%s876 + $0x3c] sm:$0xf]
    %v893 = vunpack.c.l.b16 %v841
    %v894 = vunpack.c.l.b16 %v851
    %v895 = vunpack.c.l.b16 %v865
    %v896 = vunpack.c.l.b16 %v875
    %v897 = vpack.c.b16 %v894, %v893
    %v898 = vpack.c.b16 %v896, %v895
    %v917 = vunpack.c.l.b16 %v877
    %v918 = vunpack.c.l.b16 %v878
    %v919 = vunpack.c.l.b16 %v879
    %v920 = vunpack.c.l.b16 %v880
    %v921 = vunpack.c.l.b16 %v881
    %v922 = vunpack.c.l.b16 %v882
    %v923 = vunpack.c.l.b16 %v883
    %v924 = vunpack.c.l.b16 %v884
    %v925 = vunpack.c.l.b16 %v885
    %v926 = vunpack.c.l.b16 %v886
    %v927 = vunpack.c.l.b16 %v887
    %v928 = vunpack.c.l.b16 %v888
    %v929 = vunpack.c.l.b16 %v889
    %v930 = vunpack.c.l.b16 %v890
    %v931 = vunpack.c.l.b16 %v891
    %v932 = vunpack.c.l.b16 %v892
    %v933 = vpack.c.b16 %v918, %v917
    %v934 = vpack.c.b16 %v920, %v919
    %v935 = vpack.c.b16 %v922, %v921
    %v936 = vpack.c.b16 %v924, %v923
    %v937 = vpack.c.b16 %v926, %v925
    %v938 = vpack.c.b16 %v928, %v927
    %v939 = vpack.c.b16 %v930, %v929
    %v940 = vpack.c.b16 %v932, %v931
    %949 = vmatprep.subr.bf16.mxu0 0
    %950 = vmatpush1.bf16.msra.mxu0 %v933
    %951 = vmatprep.subr.bf16.mxu0 0
    %952 = vmatpush1.bf16.msra.mxu0 %v934
    %953 = vmatprep.subr.bf16.mxu0 0
    %954 = vmatpush1.bf16.msra.mxu0 %v935
    %955 = vmatprep.subr.bf16.mxu0 0
    %956 = vmatpush1.bf16.msra.mxu0 %v936
    %957 = vmatprep.subr.bf16.mxu0 0
    %958 = vmatpush1.bf16.msra.mxu0 %v937
    %959 = vmatprep.subr.bf16.mxu0 0
    %960 = vmatpush1.bf16.msra.mxu0 %v938
    %961 = vmatprep.subr.bf16.mxu0 0
    %962 = vmatpush1.bf16.msra.mxu0 %v939
    %963 = vmatprep.subr.bf16.mxu0 0
    %964 = vmatpush1.bf16.msra.mxu0 %v940
    %965 = vmatprep.subr.bf16.mxu0 0
    %966 = vmatpush1.bf16.msra.mxu0 0
    %967 = vmatprep.subr.bf16.mxu0 0
    %968 = vmatpush1.bf16.msra.mxu0 0
    %969 = vmatprep.subr.bf16.mxu0 0
    %970 = vmatpush1.bf16.msra.mxu0 0
    %971 = vmatprep.subr.bf16.mxu0 0
    %972 = vmatpush1.bf16.msra.mxu0 0
    %973 = vmatprep.subr.bf16.mxu0 0
    %974 = vmatpush1.bf16.msra.mxu0 0
    %975 = vmatprep.subr.bf16.mxu0 0
    %976 = vmatpush1.bf16.msra.mxu0 0
    %977 = vmatprep.subr.bf16.mxu0 0
    %978 = vmatpush1.bf16.msra.mxu0 0
    %979 = vmatprep.subr.bf16.mxu0 0
    %980 = vmatpush1.bf16.msra.mxu0 0
    %981 = vmatprep.mubr.bf16.mxu0 0
    %982 = vmatmul.mubr.bf16.gmra.mrb[0].mxu0 %v897
    %v983 = vpop.f32.mrb[0].mxu0
    %v984 = vadd.f32 0.0, %v983
    %v985 = vpop.f32.mrb[0].mxu0
    %v986 = vpop.f32.mrb[0].mxu0
    %v987 = vadd.f32 0.0, %v986
    %v988 = vpop.f32.mrb[0].mxu0
    %989 = vmatprep.mubr.bf16.mxu0 0
    %990 = vmatmul.mubr.bf16.gmra.mrb[0].mxu0 %v898
    %v991 = vpop.f32.mrb[0].mxu0
    %v992 = vadd.f32 0.0, %v991
    %v993 = vpop.f32.mrb[0].mxu0
    %v994 = vpop.f32.mrb[0].mxu0
    %v995 = vadd.f32 0.0, %v994
    %v996 = vpop.f32.mrb[0].mxu0
    %997 = vdwg.mxu0
    %v998 = vadd.f32 %v808, %v984
    %v999 = vadd.f32 %v811, %v987
    %v1000 = vadd.f32 %v816, %v992
    %v1001 = vadd.f32 %v819, %v995
    %v1002 = vadd.f32 %v998, %v221
    %v1003 = vadd.f32 %v999, %v225
    %v1004 = vadd.f32 %v1000, %v231
    %v1005 = vadd.f32 %v1001, %v235
    %v1006 = vld [vmem:[%s5] sm:$0x1]
    %v1008 = vlaneseq
    %v1009 = vshrl.u32 %v1008, 7
    %v1010 = vsub.s32 0, %v1009
    %v1011 = vrot.slane %v1006, %v1010
    %v1013 = vadd.f32 %v1002, %v1011
    %v1014 = vadd.f32 %v1003, %v1011
    %v1015 = vadd.f32 %v1004, %v1011
    %v1016 = vadd.f32 %v1005, %v1011
    %v1017 = vmax.f32 %v1013, 0.0
    %v1018 = vmax.f32 %v1014, 0.0
    %v1019 = vmax.f32 %v1015, 0.0
    %v1020 = vmax.f32 %v1016, 0.0
    %1021 = vst [vmem:[#allocation9] sm:$0xff] %v1017
    %1022 = vst [vmem:[#allocation9 + $0x8] sm:$0xff] %v1018
    %1023 = vst [vmem:[#allocation9 + $0x10] sm:$0xff] %v1019
    %1024 = vst [vmem:[#allocation9 + $0x18] sm:$0xff] %v1020
    // Predicated region
    $region42: #{tpu_custom_call.1} parent=1 // pred_check
      _
    $region43: #{tpu_custom_call.1} parent=1 // pred_check_branch
      %1026 = sbr.rel (0) target = $region45
    $region44: #{tpu_custom_call.1} parent=1 // pred_region
      %s1028 = ssub.s32 512, 512
      %1029 = vsyncadd [#allocation5], %s1028
      %s1030 = sshll.u32 [#allocation9], 4
      %s1031 = int_to_ptr.vmem [resolvable:$true] %s1030
      %1036 = dma.vmem_to_hbm [thread:$0]  %s1031, 512, %s6, [#allocation5], 128, 128, 8
    $region45: #{tpu_custom_call.1} parent=1 // pred_fallthru
      _
    // Predicated region
    $region46: #{tpu_custom_call.1} parent=1 // pred_check
      _
    $region47: #{tpu_custom_call.1} parent=1 // pred_check_branch
      %1038 = sbr.rel (0) target = $region49
    $region48: #{tpu_custom_call.1} parent=1 // pred_region
      %1039 = dma.done [#allocation5], 512
    $region49: #{tpu_custom_call.1} parent=1 // pred_fallthru
      _
    %1040 = vsyncpa [#allocation4], 1
    %1041 = vsyncpa [#allocation7], 1
    %1042 = vsyncpa [#allocation5], 1

</llo_original>
